<compile_context>
chip_gen: v7x
topology: tpu7x:2x2x1
jax: 0.10.0
libtpu: 0.0.40
codegen_flags: <defaults>
</compile_context>

<pallas_src>
import jax
import jax.numpy as jnp
from jax.experimental import pallas as pl
from jax.experimental.pallas import tpu as pltpu


def lstm_kernel(x_ref, wih_ref, whh_ref, b_ref, wfc_ref, bfc_ref, out_ref):
    """LSTM recurrence + linear head, single kernel invocation.

    x_ref   : (T*B, I)  f32, time-major then batch (row t*B + b == x[b, t, :])
    wih_ref : (I, 4H)   f32, fused per-gate input weights (i|f|g|o along lanes),
                             i/f/o columns pre-scaled by 0.5 (sigmoid-via-tanh)
    whh_ref : (H, 4H)   f32, fused recurrent weights, same pre-scaling
    b_ref   : (1, 4H)   f32, fused bias (b_ih + b_hh), same pre-scaling
    wfc_ref : (1, H)    f32, fc.weight row
    bfc_ref : (1, 1)    f32, fc.bias
    out_ref : (B, 1)    f32
    """
    TB = x_ref.shape[0]
    B = out_ref.shape[0]
    T = TB // B
    H4 = whh_ref.shape[1]
    H = H4 // 4

    # ---- Hoisted input projection: one lane-dense matmul, bias fused in. ----
    # (T*B, 4H) ~= 8 vregs at these shapes -> stays vreg-resident across the unroll.
    xg = jnp.dot(x_ref[...], wih_ref[...],
                 preferred_element_type=jnp.float32) + b_ref[...]

    whh = whh_ref[...]
    h = jnp.zeros((B, H), jnp.float32)
    c = jnp.zeros((B, H), jnp.float32)

    # Static unroll over T: every xg slice is a static, sublane-aligned vreg extract.
    for t in range(T):
        pre = xg[t * B:(t + 1) * B, :] + jnp.dot(
            h, whh, preferred_element_type=jnp.float32)          # (B, 4H), 1 MXU push

        # Single EUP op for all four gates. Pre-scale (0.5 for i/f/o) was folded into
        # the weights/bias, so: i/f/o = 0.5*tanh + 0.5, g = tanh.
        act = jnp.tanh(pre)
        i_g = act[:, 0 * H:1 * H] * 0.5 + 0.5
        f_g = act[:, 1 * H:2 * H] * 0.5 + 0.5
        g_g = act[:, 2 * H:3 * H]
        o_g = act[:, 3 * H:4 * H] * 0.5 + 0.5

        c = f_g * c + i_g * g_g
        h = o_g * jnp.tanh(c)                                    # 2nd (and last) EUP op

    # FC head: lane reduction on VPU/XLU instead of an N=1 MXU matmul.
    out_ref[...] = (jnp.sum(h * wfc_ref[...], axis=-1, keepdims=True)
                    + bfc_ref[...])


def lstm_model_forward(x, params):
    """x: (B, T, I) batch_first, like the PyTorch module. Returns (B, 1)."""
    B, T, I = x.shape
    H = params["w_hh"].shape[1]

    # Pad batch to the f32 sublane tile (8).
    B_pad = max(8, ((B + 7) // 8) * 8)
    x_f = x.astype(jnp.float32)
    if B_pad != B:
        x_f = jnp.pad(x_f, ((0, B_pad - B), (0, 0), (0, 0)))

    # Time-major, flattened to (T*B_pad, I): the in-kernel input projection is one
    # large matmul and per-step slices are aligned single-vreg extracts.
    x_tm = jnp.transpose(x_f, (1, 0, 2)).reshape(T * B_pad, I)

    # Fused-gate weights straight from the PyTorch layout (gate order i, f, g, o is
    # already contiguous along the first dim, so .T gives (., 4H) for free).
    w_ih_t = params["w_ih"].astype(jnp.float32).T                       # (I, 4H)
    w_hh_t = params["w_hh"].astype(jnp.float32).T                       # (H, 4H)
    bias = (params["b_ih"] + params["b_hh"]).astype(jnp.float32).reshape(1, 4 * H)

    # Fold the sigmoid pre-scale (0.5 on the i/f/o lane groups; exact, power of 2)
    # into weights + bias so the kernel does a single tanh per step.
    gate_scale = jnp.concatenate([
        jnp.full((H,), 0.5, jnp.float32),
        jnp.full((H,), 0.5, jnp.float32),
        jnp.ones((H,), jnp.float32),
        jnp.full((H,), 0.5, jnp.float32)])                              # (4H,)
    w_ih_s = w_ih_t * gate_scale[None, :]
    w_hh_s = w_hh_t * gate_scale[None, :]
    bias_s = bias * gate_scale[None, :]

    w_fc = params["w_fc"].reshape(1, H).astype(jnp.float32)             # (1, H)
    b_fc = params["b_fc"].reshape(1, 1).astype(jnp.float32)             # (1, 1)

    vmem = pl.BlockSpec(memory_space=pltpu.MemorySpace.VMEM)

    out_pad = pl.pallas_call(
        lstm_kernel,
        out_shape=jax.ShapeDtypeStruct((B_pad, 1), jnp.float32),
        in_specs=[vmem] * 6,
        out_specs=vmem,
        compiler_params=pltpu.CompilerParams(vmem_limit_bytes=2 * 1024 * 1024),
    )(x_tm, w_ih_s, w_hh_s, bias_s, w_fc, b_fc)

    return out_pad[:B]


def lstm_model_reference(x, params):
    """Pure-JAX reference of the PyTorch forward (for correctness check)."""
    B, T, I = x.shape
    H = params["w_hh"].shape[1]
    h = jnp.zeros((B, H), jnp.float32)
    c = jnp.zeros((B, H), jnp.float32)
    w_ih_t = params["w_ih"].T
    w_hh_t = params["w_hh"].T
    bias = params["b_ih"] + params["b_hh"]
    for t in range(T):
        gates = x[:, t, :] @ w_ih_t + h @ w_hh_t + bias
        i_g = jax.nn.sigmoid(gates[:, 0:H])
        f_g = jax.nn.sigmoid(gates[:, H:2 * H])
        g_g = jnp.tanh(gates[:, 2 * H:3 * H])
        o_g = jax.nn.sigmoid(gates[:, 3 * H:4 * H])
        c = f_g * c + i_g * g_g
        h = o_g * jnp.tanh(c)
    return h @ params["w_fc"].T + params["b_fc"]


def init_params(key, input_size, hidden_size):
    """Deterministic init matching nn.LSTM / nn.Linear shapes (uniform(-1/sqrt(H), 1/sqrt(H)))."""
    k = 1.0 / jnp.sqrt(jnp.float32(hidden_size))
    keys = jax.random.split(key, 6)
    u = lambda kk, shape: jax.random.uniform(kk, shape, jnp.float32, -k, k)
    return {
        "w_ih": u(keys[0], (4 * hidden_size, input_size)),   # weight_ih_l0
        "w_hh": u(keys[1], (4 * hidden_size, hidden_size)),  # weight_hh_l0
        "b_ih": u(keys[2], (4 * hidden_size,)),              # bias_ih_l0
        "b_hh": u(keys[3], (4 * hidden_size,)),              # bias_hh_l0
        "w_fc": u(keys[4], (1, hidden_size)),                # fc.weight
        "b_fc": u(keys[5], (1,)),                            # fc.bias
    }


if __name__ == "__main__":
    B, T, I, H = 2, 8, 4, 32

    key = jax.random.PRNGKey(0)
    k_x, k_p = jax.random.split(key)
    x = jax.random.normal(k_x, (B, T, I), jnp.float32)
    params = init_params(k_p, I, H)

    out = lstm_model_forward(x, params)
    out = jax.block_until_ready(out)

    ref = lstm_model_reference(x, params)
    assert out.shape == (B, 1), out.shape
    assert jnp.allclose(out, ref, atol=1e-5, rtol=1e-4), (out, ref)

    print("KERNEL_OK")
</pallas_src>

<mosaic_0001>
module attributes {stable_mosaic.version = 11 : i64} {
  func.func @lstm_kernel(%arg0: memref<64x4xf32, #tpu.memory_space<vmem>>, %arg1: memref<4x128xf32, #tpu.memory_space<vmem>>, %arg2: memref<32x128xf32, #tpu.memory_space<vmem>>, %arg3: memref<1x128xf32, #tpu.memory_space<vmem>>, %arg4: memref<1x32xf32, #tpu.memory_space<vmem>>, %arg5: memref<1x1xf32, #tpu.memory_space<vmem>>, %arg6: memref<8x1xf32, #tpu.memory_space<vmem>>) attributes {dimension_semantics = [], scalar_prefetch = 0 : i64, scratch_operands = 0 : i64, tpu.core_type = #tpu.core_type<tc>} {
    %c0 = arith.constant 0 : index
    %c0_0 = arith.constant 0 : index
    %0 = vector.load %arg0[%c0, %c0_0] : memref<64x4xf32, #tpu.memory_space<vmem>>, vector<64x4xf32>
    %c0_1 = arith.constant 0 : index
    %c0_2 = arith.constant 0 : index
    %1 = vector.load %arg1[%c0_1, %c0_2] : memref<4x128xf32, #tpu.memory_space<vmem>>, vector<4x128xf32>
    %cst = arith.constant dense<0.000000e+00> : vector<64x128xf32>
    %2 = tpu.matmul %0, %1, %cst {dimension_numbers = #tpu.dot_dimension_numbers<[1], [0], [0], [1], [0, 0, 1, 1], [], []>} : vector<64x4xf32>, vector<4x128xf32>, vector<64x128xf32> -> vector<64x128xf32>
    %c0_3 = arith.constant 0 : index
    %c0_4 = arith.constant 0 : index
    %3 = vector.load %arg3[%c0_3, %c0_4] : memref<1x128xf32, #tpu.memory_space<vmem>>, vector<1x128xf32>
    %4 = vector.broadcast %3 : vector<1x128xf32> to vector<64x128xf32>
    %5 = arith.addf %2, %4 : vector<64x128xf32>
    %c0_5 = arith.constant 0 : index
    %c0_6 = arith.constant 0 : index
    %6 = vector.load %arg2[%c0_5, %c0_6] : memref<32x128xf32, #tpu.memory_space<vmem>>, vector<32x128xf32>
    %cst_7 = arith.constant 0.000000e+00 : f32
    %7 = vector.broadcast %cst_7 : f32 to vector<8x32xf32>
    %cst_8 = arith.constant 0.000000e+00 : f32
    %8 = vector.broadcast %cst_8 : f32 to vector<8x32xf32>
    %9 = vector.extract_strided_slice %5 {offsets = [0, 0], sizes = [8, 128], strides = [1, 1]} : vector<64x128xf32> to vector<8x128xf32>
    %cst_9 = arith.constant dense<0.000000e+00> : vector<8x128xf32>
    %10 = tpu.matmul %7, %6, %cst_9 {dimension_numbers = #tpu.dot_dimension_numbers<[1], [0], [0], [1], [0, 0, 1, 1], [], []>} : vector<8x32xf32>, vector<32x128xf32>, vector<8x128xf32> -> vector<8x128xf32>
    %11 = arith.addf %9, %10 : vector<8x128xf32>
    %12 = math.tanh %11 : vector<8x128xf32>
    %13 = vector.extract_strided_slice %12 {offsets = [0, 0], sizes = [8, 32], strides = [1, 1]} : vector<8x128xf32> to vector<8x32xf32>
    %cst_10 = arith.constant 5.000000e-01 : f32
    %14 = vector.broadcast %cst_10 : f32 to vector<8x32xf32>
    %15 = arith.mulf %13, %14 : vector<8x32xf32>
    %cst_11 = arith.constant 5.000000e-01 : f32
    %16 = vector.broadcast %cst_11 : f32 to vector<8x32xf32>
    %17 = arith.addf %15, %16 : vector<8x32xf32>
    %18 = vector.extract_strided_slice %12 {offsets = [0, 32], sizes = [8, 32], strides = [1, 1]} : vector<8x128xf32> to vector<8x32xf32>
    %cst_12 = arith.constant 5.000000e-01 : f32
    %19 = vector.broadcast %cst_12 : f32 to vector<8x32xf32>
    %20 = arith.mulf %18, %19 : vector<8x32xf32>
    %cst_13 = arith.constant 5.000000e-01 : f32
    %21 = vector.broadcast %cst_13 : f32 to vector<8x32xf32>
    %22 = arith.addf %20, %21 : vector<8x32xf32>
    %23 = vector.extract_strided_slice %12 {offsets = [0, 64], sizes = [8, 32], strides = [1, 1]} : vector<8x128xf32> to vector<8x32xf32>
    %24 = vector.extract_strided_slice %12 {offsets = [0, 96], sizes = [8, 32], strides = [1, 1]} : vector<8x128xf32> to vector<8x32xf32>
    %cst_14 = arith.constant 5.000000e-01 : f32
    %25 = vector.broadcast %cst_14 : f32 to vector<8x32xf32>
    %26 = arith.mulf %24, %25 : vector<8x32xf32>
    %cst_15 = arith.constant 5.000000e-01 : f32
    %27 = vector.broadcast %cst_15 : f32 to vector<8x32xf32>
    %28 = arith.addf %26, %27 : vector<8x32xf32>
    %29 = arith.mulf %22, %8 : vector<8x32xf32>
    %30 = arith.mulf %17, %23 : vector<8x32xf32>
    %31 = arith.addf %29, %30 : vector<8x32xf32>
    %32 = math.tanh %31 : vector<8x32xf32>
    %33 = arith.mulf %28, %32 : vector<8x32xf32>
    %34 = vector.extract_strided_slice %5 {offsets = [8, 0], sizes = [8, 128], strides = [1, 1]} : vector<64x128xf32> to vector<8x128xf32>
    %cst_16 = arith.constant dense<0.000000e+00> : vector<8x128xf32>
    %35 = tpu.matmul %33, %6, %cst_16 {dimension_numbers = #tpu.dot_dimension_numbers<[1], [0], [0], [1], [0, 0, 1, 1], [], []>} : vector<8x32xf32>, vector<32x128xf32>, vector<8x128xf32> -> vector<8x128xf32>
    %36 = arith.addf %34, %35 : vector<8x128xf32>
    %37 = math.tanh %36 : vector<8x128xf32>
    %38 = vector.extract_strided_slice %37 {offsets = [0, 0], sizes = [8, 32], strides = [1, 1]} : vector<8x128xf32> to vector<8x32xf32>
    %cst_17 = arith.constant 5.000000e-01 : f32
    %39 = vector.broadcast %cst_17 : f32 to vector<8x32xf32>
    %40 = arith.mulf %38, %39 : vector<8x32xf32>
    %cst_18 = arith.constant 5.000000e-01 : f32
    %41 = vector.broadcast %cst_18 : f32 to vector<8x32xf32>
    %42 = arith.addf %40, %41 : vector<8x32xf32>
    %43 = vector.extract_strided_slice %37 {offsets = [0, 32], sizes = [8, 32], strides = [1, 1]} : vector<8x128xf32> to vector<8x32xf32>
    %cst_19 = arith.constant 5.000000e-01 : f32
    %44 = vector.broadcast %cst_19 : f32 to vector<8x32xf32>
    %45 = arith.mulf %43, %44 : vector<8x32xf32>
    %cst_20 = arith.constant 5.000000e-01 : f32
    %46 = vector.broadcast %cst_20 : f32 to vector<8x32xf32>
    %47 = arith.addf %45, %46 : vector<8x32xf32>
    %48 = vector.extract_strided_slice %37 {offsets = [0, 64], sizes = [8, 32], strides = [1, 1]} : vector<8x128xf32> to vector<8x32xf32>
    %49 = vector.extract_strided_slice %37 {offsets = [0, 96], sizes = [8, 32], strides = [1, 1]} : vector<8x128xf32> to vector<8x32xf32>
    %cst_21 = arith.constant 5.000000e-01 : f32
    %50 = vector.broadcast %cst_21 : f32 to vector<8x32xf32>
    %51 = arith.mulf %49, %50 : vector<8x32xf32>
    %cst_22 = arith.constant 5.000000e-01 : f32
    %52 = vector.broadcast %cst_22 : f32 to vector<8x32xf32>
    %53 = arith.addf %51, %52 : vector<8x32xf32>
    %54 = arith.mulf %47, %31 : vector<8x32xf32>
    %55 = arith.mulf %42, %48 : vector<8x32xf32>
    %56 = arith.addf %54, %55 : vector<8x32xf32>
    %57 = math.tanh %56 : vector<8x32xf32>
    %58 = arith.mulf %53, %57 : vector<8x32xf32>
    %59 = vector.extract_strided_slice %5 {offsets = [16, 0], sizes = [8, 128], strides = [1, 1]} : vector<64x128xf32> to vector<8x128xf32>
    %cst_23 = arith.constant dense<0.000000e+00> : vector<8x128xf32>
    %60 = tpu.matmul %58, %6, %cst_23 {dimension_numbers = #tpu.dot_dimension_numbers<[1], [0], [0], [1], [0, 0, 1, 1], [], []>} : vector<8x32xf32>, vector<32x128xf32>, vector<8x128xf32> -> vector<8x128xf32>
    %61 = arith.addf %59, %60 : vector<8x128xf32>
    %62 = math.tanh %61 : vector<8x128xf32>
    %63 = vector.extract_strided_slice %62 {offsets = [0, 0], sizes = [8, 32], strides = [1, 1]} : vector<8x128xf32> to vector<8x32xf32>
    %cst_24 = arith.constant 5.000000e-01 : f32
    %64 = vector.broadcast %cst_24 : f32 to vector<8x32xf32>
    %65 = arith.mulf %63, %64 : vector<8x32xf32>
    %cst_25 = arith.constant 5.000000e-01 : f32
    %66 = vector.broadcast %cst_25 : f32 to vector<8x32xf32>
    %67 = arith.addf %65, %66 : vector<8x32xf32>
    %68 = vector.extract_strided_slice %62 {offsets = [0, 32], sizes = [8, 32], strides = [1, 1]} : vector<8x128xf32> to vector<8x32xf32>
    %cst_26 = arith.constant 5.000000e-01 : f32
    %69 = vector.broadcast %cst_26 : f32 to vector<8x32xf32>
    %70 = arith.mulf %68, %69 : vector<8x32xf32>
    %cst_27 = arith.constant 5.000000e-01 : f32
    %71 = vector.broadcast %cst_27 : f32 to vector<8x32xf32>
    %72 = arith.addf %70, %71 : vector<8x32xf32>
    %73 = vector.extract_strided_slice %62 {offsets = [0, 64], sizes = [8, 32], strides = [1, 1]} : vector<8x128xf32> to vector<8x32xf32>
    %74 = vector.extract_strided_slice %62 {offsets = [0, 96], sizes = [8, 32], strides = [1, 1]} : vector<8x128xf32> to vector<8x32xf32>
    %cst_28 = arith.constant 5.000000e-01 : f32
    %75 = vector.broadcast %cst_28 : f32 to vector<8x32xf32>
    %76 = arith.mulf %74, %75 : vector<8x32xf32>
    %cst_29 = arith.constant 5.000000e-01 : f32
    %77 = vector.broadcast %cst_29 : f32 to vector<8x32xf32>
    %78 = arith.addf %76, %77 : vector<8x32xf32>
    %79 = arith.mulf %72, %56 : vector<8x32xf32>
    %80 = arith.mulf %67, %73 : vector<8x32xf32>
    %81 = arith.addf %79, %80 : vector<8x32xf32>
    %82 = math.tanh %81 : vector<8x32xf32>
    %83 = arith.mulf %78, %82 : vector<8x32xf32>
    %84 = vector.extract_strided_slice %5 {offsets = [24, 0], sizes = [8, 128], strides = [1, 1]} : vector<64x128xf32> to vector<8x128xf32>
    %cst_30 = arith.constant dense<0.000000e+00> : vector<8x128xf32>
    %85 = tpu.matmul %83, %6, %cst_30 {dimension_numbers = #tpu.dot_dimension_numbers<[1], [0], [0], [1], [0, 0, 1, 1], [], []>} : vector<8x32xf32>, vector<32x128xf32>, vector<8x128xf32> -> vector<8x128xf32>
    %86 = arith.addf %84, %85 : vector<8x128xf32>
    %87 = math.tanh %86 : vector<8x128xf32>
    %88 = vector.extract_strided_slice %87 {offsets = [0, 0], sizes = [8, 32], strides = [1, 1]} : vector<8x128xf32> to vector<8x32xf32>
    %cst_31 = arith.constant 5.000000e-01 : f32
    %89 = vector.broadcast %cst_31 : f32 to vector<8x32xf32>
    %90 = arith.mulf %88, %89 : vector<8x32xf32>
    %cst_32 = arith.constant 5.000000e-01 : f32
    %91 = vector.broadcast %cst_32 : f32 to vector<8x32xf32>
    %92 = arith.addf %90, %91 : vector<8x32xf32>
    %93 = vector.extract_strided_slice %87 {offsets = [0, 32], sizes = [8, 32], strides = [1, 1]} : vector<8x128xf32> to vector<8x32xf32>
    %cst_33 = arith.constant 5.000000e-01 : f32
    %94 = vector.broadcast %cst_33 : f32 to vector<8x32xf32>
    %95 = arith.mulf %93, %94 : vector<8x32xf32>
    %cst_34 = arith.constant 5.000000e-01 : f32
    %96 = vector.broadcast %cst_34 : f32 to vector<8x32xf32>
    %97 = arith.addf %95, %96 : vector<8x32xf32>
    %98 = vector.extract_strided_slice %87 {offsets = [0, 64], sizes = [8, 32], strides = [1, 1]} : vector<8x128xf32> to vector<8x32xf32>
    %99 = vector.extract_strided_slice %87 {offsets = [0, 96], sizes = [8, 32], strides = [1, 1]} : vector<8x128xf32> to vector<8x32xf32>
    %cst_35 = arith.constant 5.000000e-01 : f32
    %100 = vector.broadcast %cst_35 : f32 to vector<8x32xf32>
    %101 = arith.mulf %99, %100 : vector<8x32xf32>
    %cst_36 = arith.constant 5.000000e-01 : f32
    %102 = vector.broadcast %cst_36 : f32 to vector<8x32xf32>
    %103 = arith.addf %101, %102 : vector<8x32xf32>
    %104 = arith.mulf %97, %81 : vector<8x32xf32>
    %105 = arith.mulf %92, %98 : vector<8x32xf32>
    %106 = arith.addf %104, %105 : vector<8x32xf32>
    %107 = math.tanh %106 : vector<8x32xf32>
    %108 = arith.mulf %103, %107 : vector<8x32xf32>
    %109 = vector.extract_strided_slice %5 {offsets = [32, 0], sizes = [8, 128], strides = [1, 1]} : vector<64x128xf32> to vector<8x128xf32>
    %cst_37 = arith.constant dense<0.000000e+00> : vector<8x128xf32>
    %110 = tpu.matmul %108, %6, %cst_37 {dimension_numbers = #tpu.dot_dimension_numbers<[1], [0], [0], [1], [0, 0, 1, 1], [], []>} : vector<8x32xf32>, vector<32x128xf32>, vector<8x128xf32> -> vector<8x128xf32>
    %111 = arith.addf %109, %110 : vector<8x128xf32>
    %112 = math.tanh %111 : vector<8x128xf32>
    %113 = vector.extract_strided_slice %112 {offsets = [0, 0], sizes = [8, 32], strides = [1, 1]} : vector<8x128xf32> to vector<8x32xf32>
    %cst_38 = arith.constant 5.000000e-01 : f32
    %114 = vector.broadcast %cst_38 : f32 to vector<8x32xf32>
    %115 = arith.mulf %113, %114 : vector<8x32xf32>
    %cst_39 = arith.constant 5.000000e-01 : f32
    %116 = vector.broadcast %cst_39 : f32 to vector<8x32xf32>
    %117 = arith.addf %115, %116 : vector<8x32xf32>
    %118 = vector.extract_strided_slice %112 {offsets = [0, 32], sizes = [8, 32], strides = [1, 1]} : vector<8x128xf32> to vector<8x32xf32>
    %cst_40 = arith.constant 5.000000e-01 : f32
    %119 = vector.broadcast %cst_40 : f32 to vector<8x32xf32>
    %120 = arith.mulf %118, %119 : vector<8x32xf32>
    %cst_41 = arith.constant 5.000000e-01 : f32
    %121 = vector.broadcast %cst_41 : f32 to vector<8x32xf32>
    %122 = arith.addf %120, %121 : vector<8x32xf32>
    %123 = vector.extract_strided_slice %112 {offsets = [0, 64], sizes = [8, 32], strides = [1, 1]} : vector<8x128xf32> to vector<8x32xf32>
    %124 = vector.extract_strided_slice %112 {offsets = [0, 96], sizes = [8, 32], strides = [1, 1]} : vector<8x128xf32> to vector<8x32xf32>
    %cst_42 = arith.constant 5.000000e-01 : f32
    %125 = vector.broadcast %cst_42 : f32 to vector<8x32xf32>
    %126 = arith.mulf %124, %125 : vector<8x32xf32>
    %cst_43 = arith.constant 5.000000e-01 : f32
    %127 = vector.broadcast %cst_43 : f32 to vector<8x32xf32>
    %128 = arith.addf %126, %127 : vector<8x32xf32>
    %129 = arith.mulf %122, %106 : vector<8x32xf32>
    %130 = arith.mulf %117, %123 : vector<8x32xf32>
    %131 = arith.addf %129, %130 : vector<8x32xf32>
    %132 = math.tanh %131 : vector<8x32xf32>
    %133 = arith.mulf %128, %132 : vector<8x32xf32>
    %134 = vector.extract_strided_slice %5 {offsets = [40, 0], sizes = [8, 128], strides = [1, 1]} : vector<64x128xf32> to vector<8x128xf32>
    %cst_44 = arith.constant dense<0.000000e+00> : vector<8x128xf32>
    %135 = tpu.matmul %133, %6, %cst_44 {dimension_numbers = #tpu.dot_dimension_numbers<[1], [0], [0], [1], [0, 0, 1, 1], [], []>} : vector<8x32xf32>, vector<32x128xf32>, vector<8x128xf32> -> vector<8x128xf32>
    %136 = arith.addf %134, %135 : vector<8x128xf32>
    %137 = math.tanh %136 : vector<8x128xf32>
    %138 = vector.extract_strided_slice %137 {offsets = [0, 0], sizes = [8, 32], strides = [1, 1]} : vector<8x128xf32> to vector<8x32xf32>
    %cst_45 = arith.constant 5.000000e-01 : f32
    %139 = vector.broadcast %cst_45 : f32 to vector<8x32xf32>
    %140 = arith.mulf %138, %139 : vector<8x32xf32>
    %cst_46 = arith.constant 5.000000e-01 : f32
    %141 = vector.broadcast %cst_46 : f32 to vector<8x32xf32>
    %142 = arith.addf %140, %141 : vector<8x32xf32>
    %143 = vector.extract_strided_slice %137 {offsets = [0, 32], sizes = [8, 32], strides = [1, 1]} : vector<8x128xf32> to vector<8x32xf32>
    %cst_47 = arith.constant 5.000000e-01 : f32
    %144 = vector.broadcast %cst_47 : f32 to vector<8x32xf32>
    %145 = arith.mulf %143, %144 : vector<8x32xf32>
    %cst_48 = arith.constant 5.000000e-01 : f32
    %146 = vector.broadcast %cst_48 : f32 to vector<8x32xf32>
    %147 = arith.addf %145, %146 : vector<8x32xf32>
    %148 = vector.extract_strided_slice %137 {offsets = [0, 64], sizes = [8, 32], strides = [1, 1]} : vector<8x128xf32> to vector<8x32xf32>
    %149 = vector.extract_strided_slice %137 {offsets = [0, 96], sizes = [8, 32], strides = [1, 1]} : vector<8x128xf32> to vector<8x32xf32>
    %cst_49 = arith.constant 5.000000e-01 : f32
    %150 = vector.broadcast %cst_49 : f32 to vector<8x32xf32>
    %151 = arith.mulf %149, %150 : vector<8x32xf32>
    %cst_50 = arith.constant 5.000000e-01 : f32
    %152 = vector.broadcast %cst_50 : f32 to vector<8x32xf32>
    %153 = arith.addf %151, %152 : vector<8x32xf32>
    %154 = arith.mulf %147, %131 : vector<8x32xf32>
    %155 = arith.mulf %142, %148 : vector<8x32xf32>
    %156 = arith.addf %154, %155 : vector<8x32xf32>
    %157 = math.tanh %156 : vector<8x32xf32>
    %158 = arith.mulf %153, %157 : vector<8x32xf32>
    %159 = vector.extract_strided_slice %5 {offsets = [48, 0], sizes = [8, 128], strides = [1, 1]} : vector<64x128xf32> to vector<8x128xf32>
    %cst_51 = arith.constant dense<0.000000e+00> : vector<8x128xf32>
    %160 = tpu.matmul %158, %6, %cst_51 {dimension_numbers = #tpu.dot_dimension_numbers<[1], [0], [0], [1], [0, 0, 1, 1], [], []>} : vector<8x32xf32>, vector<32x128xf32>, vector<8x128xf32> -> vector<8x128xf32>
    %161 = arith.addf %159, %160 : vector<8x128xf32>
    %162 = math.tanh %161 : vector<8x128xf32>
    %163 = vector.extract_strided_slice %162 {offsets = [0, 0], sizes = [8, 32], strides = [1, 1]} : vector<8x128xf32> to vector<8x32xf32>
    %cst_52 = arith.constant 5.000000e-01 : f32
    %164 = vector.broadcast %cst_52 : f32 to vector<8x32xf32>
    %165 = arith.mulf %163, %164 : vector<8x32xf32>
    %cst_53 = arith.constant 5.000000e-01 : f32
    %166 = vector.broadcast %cst_53 : f32 to vector<8x32xf32>
    %167 = arith.addf %165, %166 : vector<8x32xf32>
    %168 = vector.extract_strided_slice %162 {offsets = [0, 32], sizes = [8, 32], strides = [1, 1]} : vector<8x128xf32> to vector<8x32xf32>
    %cst_54 = arith.constant 5.000000e-01 : f32
    %169 = vector.broadcast %cst_54 : f32 to vector<8x32xf32>
    %170 = arith.mulf %168, %169 : vector<8x32xf32>
    %cst_55 = arith.constant 5.000000e-01 : f32
    %171 = vector.broadcast %cst_55 : f32 to vector<8x32xf32>
    %172 = arith.addf %170, %171 : vector<8x32xf32>
    %173 = vector.extract_strided_slice %162 {offsets = [0, 64], sizes = [8, 32], strides = [1, 1]} : vector<8x128xf32> to vector<8x32xf32>
    %174 = vector.extract_strided_slice %162 {offsets = [0, 96], sizes = [8, 32], strides = [1, 1]} : vector<8x128xf32> to vector<8x32xf32>
    %cst_56 = arith.constant 5.000000e-01 : f32
    %175 = vector.broadcast %cst_56 : f32 to vector<8x32xf32>
    %176 = arith.mulf %174, %175 : vector<8x32xf32>
    %cst_57 = arith.constant 5.000000e-01 : f32
    %177 = vector.broadcast %cst_57 : f32 to vector<8x32xf32>
    %178 = arith.addf %176, %177 : vector<8x32xf32>
    %179 = arith.mulf %172, %156 : vector<8x32xf32>
    %180 = arith.mulf %167, %173 : vector<8x32xf32>
    %181 = arith.addf %179, %180 : vector<8x32xf32>
    %182 = math.tanh %181 : vector<8x32xf32>
    %183 = arith.mulf %178, %182 : vector<8x32xf32>
    %184 = vector.extract_strided_slice %5 {offsets = [56, 0], sizes = [8, 128], strides = [1, 1]} : vector<64x128xf32> to vector<8x128xf32>
    %cst_58 = arith.constant dense<0.000000e+00> : vector<8x128xf32>
    %185 = tpu.matmul %183, %6, %cst_58 {dimension_numbers = #tpu.dot_dimension_numbers<[1], [0], [0], [1], [0, 0, 1, 1], [], []>} : vector<8x32xf32>, vector<32x128xf32>, vector<8x128xf32> -> vector<8x128xf32>
    %186 = arith.addf %184, %185 : vector<8x128xf32>
    %187 = math.tanh %186 : vector<8x128xf32>
    %188 = vector.extract_strided_slice %187 {offsets = [0, 0], sizes = [8, 32], strides = [1, 1]} : vector<8x128xf32> to vector<8x32xf32>
    %cst_59 = arith.constant 5.000000e-01 : f32
    %189 = vector.broadcast %cst_59 : f32 to vector<8x32xf32>
    %190 = arith.mulf %188, %189 : vector<8x32xf32>
    %cst_60 = arith.constant 5.000000e-01 : f32
    %191 = vector.broadcast %cst_60 : f32 to vector<8x32xf32>
    %192 = arith.addf %190, %191 : vector<8x32xf32>
    %193 = vector.extract_strided_slice %187 {offsets = [0, 32], sizes = [8, 32], strides = [1, 1]} : vector<8x128xf32> to vector<8x32xf32>
    %cst_61 = arith.constant 5.000000e-01 : f32
    %194 = vector.broadcast %cst_61 : f32 to vector<8x32xf32>
    %195 = arith.mulf %193, %194 : vector<8x32xf32>
    %cst_62 = arith.constant 5.000000e-01 : f32
    %196 = vector.broadcast %cst_62 : f32 to vector<8x32xf32>
    %197 = arith.addf %195, %196 : vector<8x32xf32>
    %198 = vector.extract_strided_slice %187 {offsets = [0, 64], sizes = [8, 32], strides = [1, 1]} : vector<8x128xf32> to vector<8x32xf32>
    %199 = vector.extract_strided_slice %187 {offsets = [0, 96], sizes = [8, 32], strides = [1, 1]} : vector<8x128xf32> to vector<8x32xf32>
    %cst_63 = arith.constant 5.000000e-01 : f32
    %200 = vector.broadcast %cst_63 : f32 to vector<8x32xf32>
    %201 = arith.mulf %199, %200 : vector<8x32xf32>
    %cst_64 = arith.constant 5.000000e-01 : f32
    %202 = vector.broadcast %cst_64 : f32 to vector<8x32xf32>
    %203 = arith.addf %201, %202 : vector<8x32xf32>
    %204 = arith.mulf %197, %181 : vector<8x32xf32>
    %205 = arith.mulf %192, %198 : vector<8x32xf32>
    %206 = arith.addf %204, %205 : vector<8x32xf32>
    %207 = math.tanh %206 : vector<8x32xf32>
    %208 = arith.mulf %203, %207 : vector<8x32xf32>
    %c0_65 = arith.constant 0 : index
    %c0_66 = arith.constant 0 : index
    %209 = vector.load %arg4[%c0_65, %c0_66] : memref<1x32xf32, #tpu.memory_space<vmem>>, vector<1x32xf32>
    %210 = vector.broadcast %209 : vector<1x32xf32> to vector<8x32xf32>
    %211 = arith.mulf %208, %210 : vector<8x32xf32>
    %cst_67 = arith.constant dense<0.000000e+00> : vector<8xf32>
    %212 = vector.multi_reduction <add>, %211, %cst_67 [1] : vector<8x32xf32> to vector<8xf32>
    %213 = vector.shape_cast %212 : vector<8xf32> to vector<8x1xf32>
    %c0_68 = arith.constant 0 : index
    %c0_69 = arith.constant 0 : index
    %214 = vector.load %arg5[%c0_68, %c0_69] : memref<1x1xf32, #tpu.memory_space<vmem>>, vector<1x1xf32>
    %215 = vector.broadcast %214 : vector<1x1xf32> to vector<8x1xf32>
    %216 = arith.addf %213, %215 : vector<8x1xf32>
    %c0_70 = arith.constant 0 : index
    %c0_71 = arith.constant 0 : index
    %217 = vector.load %arg6[%c0_70, %c0_71] : memref<8x1xf32, #tpu.memory_space<vmem>>, vector<8x1xf32>
    tpu.vector_store %arg6[%c0_70, %c0_71], %216 {strides = array<i32>} : memref<8x1xf32, #tpu.memory_space<vmem>>, vector<8x1xf32>,
    return
  }
}

</mosaic_0001>

<llo_original>
// kernel: tpu_custom_call.1
$region0: #{tpu_custom_call.1}
  #allocation0 [shape = 'u32[]', space=smem, size = 0x4, offset = 0x4, fixed_abs, tag = 'smem constant byte address 0x4 - core index']
  #allocation1 [shape = 'u32[144,128]{1,0:T(1,128)}', space=vmem, size = 0x12000, scoped, tag = 'internal scratch']
  #allocation2 [shape = 'f32[1,1]{1,0:T(1,128)S(1)}', space=vmem, size = 0x200, scoped, tag = 'scoped memory for tpu_custom_call.1']
  %s0 = inlined_call_operand.vmem [shape: f32[64,4], index: 0, kind: input, shape index: {}]
  %s1 = inlined_call_operand.vmem [shape: f32[4,128], index: 1, kind: input, shape index: {}]
  %s2 = inlined_call_operand.vmem [shape: f32[32,128], index: 2, kind: input, shape index: {}]
  %s3 = inlined_call_operand.vmem [shape: f32[1,128], index: 3, kind: input, shape index: {}]
  %s4 = inlined_call_operand.vmem [shape: f32[1,32], index: 4, kind: input, shape index: {}]
  %s5 = inlined_call_operand.<no memory space> [shape: f32[1,1], index: 5, kind: input, shape index: {}]
  %s6 = inlined_call_operand.vmem [shape: f32[8,1], index: 6, kind: output, shape index: {}]
  %s7 = sld [smem:[#allocation0]]
  $region34: #{tpu_custom_call.1} parent=0
    _
  %s9 = ssub.s32 1, %s7
  %s10 = scalar_select 0, %s9, %s7
  %v11 = vstv %s5
  %12 = vst [vmem:[#allocation2] sm:$0x1] %v11
  // Predicated region
  $region2: #{tpu_custom_call.1} parent=0 // pred_check
    _
  $region3: #{tpu_custom_call.1} parent=0 // pred_check_branch
    %14 = sbr.rel (0) target = $region5
  $region4: #{tpu_custom_call.1} parent=0 // pred_region
    _
  $region5: #{tpu_custom_call.1} parent=0 // pred_fallthru
    _
  // Predicated region
  $region6: #{tpu_custom_call.1} parent=0 // pred_check
    _
  $region7: #{tpu_custom_call.1} parent=0 // pred_check_branch
    %16 = sbr.rel (0) target = $region9
  $region8: #{tpu_custom_call.1} parent=0 // pred_region
    _
  $region9: #{tpu_custom_call.1} parent=0 // pred_fallthru
    _
  // Predicated region
  $region10: #{tpu_custom_call.1} parent=0 // pred_check
    _
  $region11: #{tpu_custom_call.1} parent=0 // pred_check_branch
    %18 = sbr.rel (0) target = $region13
  $region12: #{tpu_custom_call.1} parent=0 // pred_region
    _
  $region13: #{tpu_custom_call.1} parent=0 // pred_fallthru
    _
  // Predicated region
  $region14: #{tpu_custom_call.1} parent=0 // pred_check
    _
  $region15: #{tpu_custom_call.1} parent=0 // pred_check_branch
    %20 = sbr.rel (0) target = $region17
  $region16: #{tpu_custom_call.1} parent=0 // pred_region
    _
  $region17: #{tpu_custom_call.1} parent=0 // pred_fallthru
    _
  // Predicated region
  $region18: #{tpu_custom_call.1} parent=0 // pred_check
    _
  $region19: #{tpu_custom_call.1} parent=0 // pred_check_branch
    %22 = sbr.rel (0) target = $region21
  $region20: #{tpu_custom_call.1} parent=0 // pred_region
    _
  $region21: #{tpu_custom_call.1} parent=0 // pred_fallthru
    _
  // Predicated region
  $region22: #{tpu_custom_call.1} parent=0 // pred_check
    _
  $region23: #{tpu_custom_call.1} parent=0 // pred_check_branch
    %24 = sbr.rel (0) target = $region25
  $region24: #{tpu_custom_call.1} parent=0 // pred_region
    _
  $region25: #{tpu_custom_call.1} parent=0 // pred_fallthru
    _
  %v25 = vld [vmem:[%s0] sm:$0xff]
  %v26 = vld [vmem:[%s0 + $0x8] sm:$0xff]
  %v27 = vld [vmem:[%s0 + $0x10] sm:$0xff]
  %v28 = vld [vmem:[%s0 + $0x18] sm:$0xff]
  %v29 = vld [vmem:[%s0 + $0x20] sm:$0xff]
  %v30 = vld [vmem:[%s0 + $0x28] sm:$0xff]
  %v31 = vld [vmem:[%s0 + $0x30] sm:$0xff]
  %v32 = vld [vmem:[%s0 + $0x38] sm:$0xff]
  %v33 = vld [vmem:[%s1] sm:$0xf]
  %v34 = vld [vmem:[%s3] sm:$0x1]
  %v36 = vlaneseq
  %v37 = vshrl.u32 %v36, 7
  %v38 = vsub.s32 0, %v37
  %v39 = vrot.slane %v34, %v38
  %vm41 = vcmask 31744
  %v43 = vsel %vm41, %v25, 0
  %v46 = vsel %vm41, %v26, 0
  %v49 = vsel %vm41, %v27, 0
  %v52 = vsel %vm41, %v28, 0
  %v55 = vsel %vm41, %v29, 0
  %v58 = vsel %vm41, %v30, 0
  %v61 = vsel %vm41, %v31, 0
  %v64 = vsel %vm41, %v32, 0
  %vm66 = vcmask 1043456
  %v68 = vsel %vm66, %v33, 0
  %70 = vmatprep.subr.mxu0 0.0
  %71 = vmatpush1.msra.mxu0 %v68
  %72 = vmatprep.subr.mxu0 0.0
  %73 = vmatpush1.msra.mxu0 0.0
  %74 = vmatprep.subr.mxu0 0.0
  %75 = vmatpush1.msra.mxu0 0.0
  %76 = vmatprep.subr.mxu0 0.0
  %77 = vmatpush1.msra.mxu0 0.0
  %78 = vmatprep.subr.mxu0 0.0
  %79 = vmatpush1.msra.mxu0 0.0
  %80 = vmatprep.subr.mxu0 0.0
  %81 = vmatpush1.msra.mxu0 0.0
  %82 = vmatprep.subr.mxu0 0.0
  %83 = vmatpush1.msra.mxu0 0.0
  %84 = vmatprep.subr.mxu0 0.0
  %85 = vmatpush1.msra.mxu0 0.0
  %86 = vmatprep.subr.mxu0 0.0
  %87 = vmatpush1.msra.mxu0 0.0
  %88 = vmatprep.subr.mxu0 0.0
  %89 = vmatpush1.msra.mxu0 0.0
  %90 = vmatprep.subr.mxu0 0.0
  %91 = vmatpush1.msra.mxu0 0.0
  %92 = vmatprep.subr.mxu0 0.0
  %93 = vmatpush1.msra.mxu0 0.0
  %94 = vmatprep.subr.mxu0 0.0
  %95 = vmatpush1.msra.mxu0 0.0
  %96 = vmatprep.subr.mxu0 0.0
  %97 = vmatpush1.msra.mxu0 0.0
  %98 = vmatprep.subr.mxu0 0.0
  %99 = vmatpush1.msra.mxu0 0.0
  %100 = vmatprep.subr.mxu0 0.0
  %101 = vmatpush1.msra.mxu0 0.0
  %102 = vmatprep.subr.mxu0 0.0
  %103 = vmatpush1.msra.mxu0 0.0
  %104 = vmatprep.subr.mxu0 0.0
  %105 = vmatpush1.msra.mxu0 0.0
  %106 = vmatprep.subr.mxu0 0.0
  %107 = vmatpush1.msra.mxu0 0.0
  %108 = vmatprep.subr.mxu0 0.0
  %109 = vmatpush1.msra.mxu0 0.0
  %110 = vmatprep.subr.mxu0 0.0
  %111 = vmatpush1.msra.mxu0 0.0
  %112 = vmatprep.subr.mxu0 0.0
  %113 = vmatpush1.msra.mxu0 0.0
  %114 = vmatprep.subr.mxu0 0.0
  %115 = vmatpush1.msra.mxu0 0.0
  %116 = vmatprep.subr.mxu0 0.0
  %117 = vmatpush1.msra.mxu0 0.0
  %118 = vmatprep.subr.mxu0 0.0
  %119 = vmatpush1.msra.mxu0 0.0
  %120 = vmatprep.subr.mxu0 0.0
  %121 = vmatpush1.msra.mxu0 0.0
  %122 = vmatprep.subr.mxu0 0.0
  %123 = vmatpush1.msra.mxu0 0.0
  %124 = vmatprep.subr.mxu0 0.0
  %125 = vmatpush1.msra.mxu0 0.0
  %126 = vmatprep.subr.mxu0 0.0
  %127 = vmatpush1.msra.mxu0 0.0
  %128 = vmatprep.subr.mxu0 0.0
  %129 = vmatpush1.msra.mxu0 0.0
  %130 = vmatprep.subr.mxu0 0.0
  %131 = vmatpush1.msra.mxu0 0.0
  %132 = vmatprep.subr.mxu0 0.0
  %133 = vmatpush1.msra.mxu0 0.0
  %134 = vmatprep.mubr.f32.mxu0 0.0
  %135 = vmatmul.mubr.f32.gmra.mrb[0].mxu0 %v43
  %v136 = vpop.f32.mrb[0].mxu0
  %v137 = vadd.f32 %v39, %v136
  %v138 = vpop.f32.mrb[0].mxu0
  %139 = vmatprep.mubr.f32.mxu0 0.0
  %140 = vmatmul.mubr.f32.gmra.mrb[0].mxu0 %v46
  %v141 = vpop.f32.mrb[0].mxu0
  %v142 = vadd.f32 %v39, %v141
  %v143 = vpop.f32.mrb[0].mxu0
  %144 = vmatprep.mubr.f32.mxu0 0.0
  %145 = vmatmul.mubr.f32.gmra.mrb[0].mxu0 %v49
  %v146 = vpop.f32.mrb[0].mxu0
  %v147 = vadd.f32 %v39, %v146
  %v148 = vpop.f32.mrb[0].mxu0
  %149 = vmatprep.mubr.f32.mxu0 0.0
  %150 = vmatmul.mubr.f32.gmra.mrb[0].mxu0 %v52
  %v151 = vpop.f32.mrb[0].mxu0
  %v152 = vadd.f32 %v39, %v151
  %v153 = vpop.f32.mrb[0].mxu0
  %154 = vmatprep.mubr.f32.mxu0 0.0
  %155 = vmatmul.mubr.f32.gmra.mrb[0].mxu0 %v55
  %v156 = vpop.f32.mrb[0].mxu0
  %v157 = vadd.f32 %v39, %v156
  %v158 = vpop.f32.mrb[0].mxu0
  %159 = vmatprep.mubr.f32.mxu0 0.0
  %160 = vmatmul.mubr.f32.gmra.mrb[0].mxu0 %v58
  %v161 = vpop.f32.mrb[0].mxu0
  %v162 = vadd.f32 %v39, %v161
  %v163 = vpop.f32.mrb[0].mxu0
  %164 = vmatprep.mubr.f32.mxu0 0.0
  %165 = vmatmul.mubr.f32.gmra.mrb[0].mxu0 %v61
  %v166 = vpop.f32.mrb[0].mxu0
  %v167 = vadd.f32 %v39, %v166
  %v168 = vpop.f32.mrb[0].mxu0
  %169 = vmatprep.mubr.f32.mxu0 0.0
  %170 = vmatmul.mubr.f32.gmra.mrb[0].mxu0 %v64
  %v171 = vpop.f32.mrb[0].mxu0
  %v172 = vadd.f32 %v39, %v171
  %v173 = vpop.f32.mrb[0].mxu0
  %174 = vdwg.mxu0
  %v175 = vld [vmem:[%s2] sm:$0xff]
  %v176 = vld [vmem:[%s2 + $0x8] sm:$0xff]
  %v177 = vld [vmem:[%s2 + $0x10] sm:$0xff]
  %v178 = vld [vmem:[%s2 + $0x18] sm:$0xff]
  %vm179 = vcmask 261120
  %v181 = vsel %vm179, 0.0, 0
  %183 = vmatprep.subr.mxu0 0.0
  %184 = vmatpush1.msra.mxu0 %v175
  %185 = vmatprep.subr.mxu0 0.0
  %186 = vmatpush1.msra.mxu0 %v176
  %187 = vmatprep.subr.mxu0 0.0
  %188 = vmatpush1.msra.mxu0 %v177
  %189 = vmatprep.subr.mxu0 0.0
  %190 = vmatpush1.msra.mxu0 %v178
  %191 = vmatprep.subr.mxu0 0.0
  %192 = vmatpush1.msra.mxu0 0.0
  %193 = vmatprep.subr.mxu0 0.0
  %194 = vmatpush1.msra.mxu0 0.0
  %195 = vmatprep.subr.mxu0 0.0
  %196 = vmatpush1.msra.mxu0 0.0
  %197 = vmatprep.subr.mxu0 0.0
  %198 = vmatpush1.msra.mxu0 0.0
  %199 = vmatprep.subr.mxu0 0.0
  %200 = vmatpush1.msra.mxu0 0.0
  %201 = vmatprep.subr.mxu0 0.0
  %202 = vmatpush1.msra.mxu0 0.0
  %203 = vmatprep.subr.mxu0 0.0
  %204 = vmatpush1.msra.mxu0 0.0
  %205 = vmatprep.subr.mxu0 0.0
  %206 = vmatpush1.msra.mxu0 0.0
  %207 = vmatprep.subr.mxu0 0.0
  %208 = vmatpush1.msra.mxu0 0.0
  %209 = vmatprep.subr.mxu0 0.0
  %210 = vmatpush1.msra.mxu0 0.0
  %211 = vmatprep.subr.mxu0 0.0
  %212 = vmatpush1.msra.mxu0 0.0
  %213 = vmatprep.subr.mxu0 0.0
  %214 = vmatpush1.msra.mxu0 0.0
  %215 = vmatprep.subr.mxu0 0.0
  %216 = vmatpush1.msra.mxu0 0.0
  %217 = vmatprep.subr.mxu0 0.0
  %218 = vmatpush1.msra.mxu0 0.0
  %219 = vmatprep.subr.mxu0 0.0
  %220 = vmatpush1.msra.mxu0 0.0
  %221 = vmatprep.subr.mxu0 0.0
  %222 = vmatpush1.msra.mxu0 0.0
  %223 = vmatprep.subr.mxu0 0.0
  %224 = vmatpush1.msra.mxu0 0.0
  %225 = vmatprep.subr.mxu0 0.0
  %226 = vmatpush1.msra.mxu0 0.0
  %227 = vmatprep.subr.mxu0 0.0
  %228 = vmatpush1.msra.mxu0 0.0
  %229 = vmatprep.subr.mxu0 0.0
  %230 = vmatpush1.msra.mxu0 0.0
  %231 = vmatprep.subr.mxu0 0.0
  %232 = vmatpush1.msra.mxu0 0.0
  %233 = vmatprep.subr.mxu0 0.0
  %234 = vmatpush1.msra.mxu0 0.0
  %235 = vmatprep.subr.mxu0 0.0
  %236 = vmatpush1.msra.mxu0 0.0
  %237 = vmatprep.subr.mxu0 0.0
  %238 = vmatpush1.msra.mxu0 0.0
  %239 = vmatprep.subr.mxu0 0.0
  %240 = vmatpush1.msra.mxu0 0.0
  %241 = vmatprep.subr.mxu0 0.0
  %242 = vmatpush1.msra.mxu0 0.0
  %243 = vmatprep.subr.mxu0 0.0
  %244 = vmatpush1.msra.mxu0 0.0
  %245 = vmatprep.subr.mxu0 0.0
  %246 = vmatpush1.msra.mxu0 0.0
  %247 = vmatprep.mubr.f32.mxu0 0.0
  %248 = vmatmul.mubr.f32.gmra.mrb[0].mxu0 %v181
  %v249 = vpop.f32.mrb[0].mxu0
  %v250 = vadd.f32 0.0, %v249
  %v251 = vpop.f32.mrb[0].mxu0
  %252 = vdwg.mxu0
  %v253 = vadd.f32 %v137, %v250
  %v254 = vtanh.pop %v253
  %v255 = vmul.f32 %v254, 0.5
  %v256 = vadd.f32 %v255, 0.5
  %v257 = vmul.f32 %v256, 0.0
  %259 = vrot.lane.b32.xlu0 %v254, 64
  %v260 = vpop.permute.xlu0 %259
  %v262 = vmul.f32 %v256, %v260
  %264 = vrot.lane.b32.xlu0 %v262, 32
  %v265 = vpop.permute.xlu0 %264
  %v267 = vadd.f32 %v257, %v265
  %v268 = vtanh.pop %v267
  %270 = vrot.lane.b32.xlu0 %v268, 64
  %v271 = vpop.permute.xlu0 %270
  %v273 = vmul.f32 %v256, %v271
  %275 = vrot.lane.b32.xlu0 %v273, 32
  %v276 = vpop.permute.xlu0 %275
  %v277 = vsel %vm179, %v276, 0
  %279 = vmatprep.subr.mxu0 0.0
  %280 = vmatpush1.msra.mxu0 %v175
  %281 = vmatprep.subr.mxu0 0.0
  %282 = vmatpush1.msra.mxu0 %v176
  %283 = vmatprep.subr.mxu0 0.0
  %284 = vmatpush1.msra.mxu0 %v177
  %285 = vmatprep.subr.mxu0 0.0
  %286 = vmatpush1.msra.mxu0 %v178
  %287 = vmatprep.subr.mxu0 0.0
  %288 = vmatpush1.msra.mxu0 0.0
  %289 = vmatprep.subr.mxu0 0.0
  %290 = vmatpush1.msra.mxu0 0.0
  %291 = vmatprep.subr.mxu0 0.0
  %292 = vmatpush1.msra.mxu0 0.0
  %293 = vmatprep.subr.mxu0 0.0
  %294 = vmatpush1.msra.mxu0 0.0
  %295 = vmatprep.subr.mxu0 0.0
  %296 = vmatpush1.msra.mxu0 0.0
  %297 = vmatprep.subr.mxu0 0.0
  %298 = vmatpush1.msra.mxu0 0.0
  %299 = vmatprep.subr.mxu0 0.0
  %300 = vmatpush1.msra.mxu0 0.0
  %301 = vmatprep.subr.mxu0 0.0
  %302 = vmatpush1.msra.mxu0 0.0
  %303 = vmatprep.subr.mxu0 0.0
  %304 = vmatpush1.msra.mxu0 0.0
  %305 = vmatprep.subr.mxu0 0.0
  %306 = vmatpush1.msra.mxu0 0.0
  %307 = vmatprep.subr.mxu0 0.0
  %308 = vmatpush1.msra.mxu0 0.0
  %309 = vmatprep.subr.mxu0 0.0
  %310 = vmatpush1.msra.mxu0 0.0
  %311 = vmatprep.subr.mxu0 0.0
  %312 = vmatpush1.msra.mxu0 0.0
  %313 = vmatprep.subr.mxu0 0.0
  %314 = vmatpush1.msra.mxu0 0.0
  %315 = vmatprep.subr.mxu0 0.0
  %316 = vmatpush1.msra.mxu0 0.0
  %317 = vmatprep.subr.mxu0 0.0
  %318 = vmatpush1.msra.mxu0 0.0
  %319 = vmatprep.subr.mxu0 0.0
  %320 = vmatpush1.msra.mxu0 0.0
  %321 = vmatprep.subr.mxu0 0.0
  %322 = vmatpush1.msra.mxu0 0.0
  %323 = vmatprep.subr.mxu0 0.0
  %324 = vmatpush1.msra.mxu0 0.0
  %325 = vmatprep.subr.mxu0 0.0
  %326 = vmatpush1.msra.mxu0 0.0
  %327 = vmatprep.subr.mxu0 0.0
  %328 = vmatpush1.msra.mxu0 0.0
  %329 = vmatprep.subr.mxu0 0.0
  %330 = vmatpush1.msra.mxu0 0.0
  %331 = vmatprep.subr.mxu0 0.0
  %332 = vmatpush1.msra.mxu0 0.0
  %333 = vmatprep.subr.mxu0 0.0
  %334 = vmatpush1.msra.mxu0 0.0
  %335 = vmatprep.subr.mxu0 0.0
  %336 = vmatpush1.msra.mxu0 0.0
  %337 = vmatprep.subr.mxu0 0.0
  %338 = vmatpush1.msra.mxu0 0.0
  %339 = vmatprep.subr.mxu0 0.0
  %340 = vmatpush1.msra.mxu0 0.0
  %341 = vmatprep.subr.mxu0 0.0
  %342 = vmatpush1.msra.mxu0 0.0
  %343 = vmatprep.mubr.f32.mxu0 0.0
  %344 = vmatmul.mubr.f32.gmra.mrb[0].mxu0 %v277
  %v345 = vpop.f32.mrb[0].mxu0
  %v346 = vadd.f32 0.0, %v345
  %v347 = vpop.f32.mrb[0].mxu0
  %348 = vdwg.mxu0
  %v349 = vadd.f32 %v142, %v346
  %v350 = vtanh.pop %v349
  %v351 = vmul.f32 %v350, 0.5
  %v352 = vadd.f32 %v351, 0.5
  %v353 = vmul.f32 %v352, %v267
  %355 = vrot.lane.b32.xlu0 %v350, 64
  %v356 = vpop.permute.xlu0 %355
  %v358 = vmul.f32 %v352, %v356
  %360 = vrot.lane.b32.xlu0 %v358, 32
  %v361 = vpop.permute.xlu0 %360
  %v363 = vadd.f32 %v353, %v361
  %v364 = vtanh.pop %v363
  %366 = vrot.lane.b32.xlu0 %v364, 64
  %v367 = vpop.permute.xlu0 %366
  %v369 = vmul.f32 %v352, %v367
  %371 = vrot.lane.b32.xlu0 %v369, 32
  %v372 = vpop.permute.xlu0 %371
  %v373 = vsel %vm179, %v372, 0
  %375 = vmatprep.subr.mxu0 0.0
  %376 = vmatpush1.msra.mxu0 %v175
  %377 = vmatprep.subr.mxu0 0.0
  %378 = vmatpush1.msra.mxu0 %v176
  %379 = vmatprep.subr.mxu0 0.0
  %380 = vmatpush1.msra.mxu0 %v177
  %381 = vmatprep.subr.mxu0 0.0
  %382 = vmatpush1.msra.mxu0 %v178
  %383 = vmatprep.subr.mxu0 0.0
  %384 = vmatpush1.msra.mxu0 0.0
  %385 = vmatprep.subr.mxu0 0.0
  %386 = vmatpush1.msra.mxu0 0.0
  %387 = vmatprep.subr.mxu0 0.0
  %388 = vmatpush1.msra.mxu0 0.0
  %389 = vmatprep.subr.mxu0 0.0
  %390 = vmatpush1.msra.mxu0 0.0
  %391 = vmatprep.subr.mxu0 0.0
  %392 = vmatpush1.msra.mxu0 0.0
  %393 = vmatprep.subr.mxu0 0.0
  %394 = vmatpush1.msra.mxu0 0.0
  %395 = vmatprep.subr.mxu0 0.0
  %396 = vmatpush1.msra.mxu0 0.0
  %397 = vmatprep.subr.mxu0 0.0
  %398 = vmatpush1.msra.mxu0 0.0
  %399 = vmatprep.subr.mxu0 0.0
  %400 = vmatpush1.msra.mxu0 0.0
  %401 = vmatprep.subr.mxu0 0.0
  %402 = vmatpush1.msra.mxu0 0.0
  %403 = vmatprep.subr.mxu0 0.0
  %404 = vmatpush1.msra.mxu0 0.0
  %405 = vmatprep.subr.mxu0 0.0
  %406 = vmatpush1.msra.mxu0 0.0
  %407 = vmatprep.subr.mxu0 0.0
  %408 = vmatpush1.msra.mxu0 0.0
  %409 = vmatprep.subr.mxu0 0.0
  %410 = vmatpush1.msra.mxu0 0.0
  %411 = vmatprep.subr.mxu0 0.0
  %412 = vmatpush1.msra.mxu0 0.0
  %413 = vmatprep.subr.mxu0 0.0
  %414 = vmatpush1.msra.mxu0 0.0
  %415 = vmatprep.subr.mxu0 0.0
  %416 = vmatpush1.msra.mxu0 0.0
  %417 = vmatprep.subr.mxu0 0.0
  %418 = vmatpush1.msra.mxu0 0.0
  %419 = vmatprep.subr.mxu0 0.0
  %420 = vmatpush1.msra.mxu0 0.0
  %421 = vmatprep.subr.mxu0 0.0
  %422 = vmatpush1.msra.mxu0 0.0
  %423 = vmatprep.subr.mxu0 0.0
  %424 = vmatpush1.msra.mxu0 0.0
  %425 = vmatprep.subr.mxu0 0.0
  %426 = vmatpush1.msra.mxu0 0.0
  %427 = vmatprep.subr.mxu0 0.0
  %428 = vmatpush1.msra.mxu0 0.0
  %429 = vmatprep.subr.mxu0 0.0
  %430 = vmatpush1.msra.mxu0 0.0
  %431 = vmatprep.subr.mxu0 0.0
  %432 = vmatpush1.msra.mxu0 0.0
  %433 = vmatprep.subr.mxu0 0.0
  %434 = vmatpush1.msra.mxu0 0.0
  %435 = vmatprep.subr.mxu0 0.0
  %436 = vmatpush1.msra.mxu0 0.0
  %437 = vmatprep.subr.mxu0 0.0
  %438 = vmatpush1.msra.mxu0 0.0
  %439 = vmatprep.mubr.f32.mxu0 0.0
  %440 = vmatmul.mubr.f32.gmra.mrb[0].mxu0 %v373
  %v441 = vpop.f32.mrb[0].mxu0
  %v442 = vadd.f32 0.0, %v441
  %v443 = vpop.f32.mrb[0].mxu0
  %444 = vdwg.mxu0
  %v445 = vadd.f32 %v147, %v442
  %v446 = vtanh.pop %v445
  %v447 = vmul.f32 %v446, 0.5
  %v448 = vadd.f32 %v447, 0.5
  %v449 = vmul.f32 %v448, %v363
  %451 = vrot.lane.b32.xlu0 %v446, 64
  %v452 = vpop.permute.xlu0 %451
  %v454 = vmul.f32 %v448, %v452
  %456 = vrot.lane.b32.xlu0 %v454, 32
  %v457 = vpop.permute.xlu0 %456
  %v459 = vadd.f32 %v449, %v457
  %v460 = vtanh.pop %v459
  %462 = vrot.lane.b32.xlu0 %v460, 64
  %v463 = vpop.permute.xlu0 %462
  %v465 = vmul.f32 %v448, %v463
  %467 = vrot.lane.b32.xlu0 %v465, 32
  %v468 = vpop.permute.xlu0 %467
  %v469 = vsel %vm179, %v468, 0
  %471 = vmatprep.subr.mxu0 0.0
  %472 = vmatpush1.msra.mxu0 %v175
  %473 = vmatprep.subr.mxu0 0.0
  %474 = vmatpush1.msra.mxu0 %v176
  %475 = vmatprep.subr.mxu0 0.0
  %476 = vmatpush1.msra.mxu0 %v177
  %477 = vmatprep.subr.mxu0 0.0
  %478 = vmatpush1.msra.mxu0 %v178
  %479 = vmatprep.subr.mxu0 0.0
  %480 = vmatpush1.msra.mxu0 0.0
  %481 = vmatprep.subr.mxu0 0.0
  %482 = vmatpush1.msra.mxu0 0.0
  %483 = vmatprep.subr.mxu0 0.0
  %484 = vmatpush1.msra.mxu0 0.0
  %485 = vmatprep.subr.mxu0 0.0
  %486 = vmatpush1.msra.mxu0 0.0
  %487 = vmatprep.subr.mxu0 0.0
  %488 = vmatpush1.msra.mxu0 0.0
  %489 = vmatprep.subr.mxu0 0.0
  %490 = vmatpush1.msra.mxu0 0.0
  %491 = vmatprep.subr.mxu0 0.0
  %492 = vmatpush1.msra.mxu0 0.0
  %493 = vmatprep.subr.mxu0 0.0
  %494 = vmatpush1.msra.mxu0 0.0
  %495 = vmatprep.subr.mxu0 0.0
  %496 = vmatpush1.msra.mxu0 0.0
  %497 = vmatprep.subr.mxu0 0.0
  %498 = vmatpush1.msra.mxu0 0.0
  %499 = vmatprep.subr.mxu0 0.0
  %500 = vmatpush1.msra.mxu0 0.0
  %501 = vmatprep.subr.mxu0 0.0
  %502 = vmatpush1.msra.mxu0 0.0
  %503 = vmatprep.subr.mxu0 0.0
  %504 = vmatpush1.msra.mxu0 0.0
  %505 = vmatprep.subr.mxu0 0.0
  %506 = vmatpush1.msra.mxu0 0.0
  %507 = vmatprep.subr.mxu0 0.0
  %508 = vmatpush1.msra.mxu0 0.0
  %509 = vmatprep.subr.mxu0 0.0
  %510 = vmatpush1.msra.mxu0 0.0
  %511 = vmatprep.subr.mxu0 0.0
  %512 = vmatpush1.msra.mxu0 0.0
  %513 = vmatprep.subr.mxu0 0.0
  %514 = vmatpush1.msra.mxu0 0.0
  %515 = vmatprep.subr.mxu0 0.0
  %516 = vmatpush1.msra.mxu0 0.0
  %517 = vmatprep.subr.mxu0 0.0
  %518 = vmatpush1.msra.mxu0 0.0
  %519 = vmatprep.subr.mxu0 0.0
  %520 = vmatpush1.msra.mxu0 0.0
  %521 = vmatprep.subr.mxu0 0.0
  %522 = vmatpush1.msra.mxu0 0.0
  %523 = vmatprep.subr.mxu0 0.0
  %524 = vmatpush1.msra.mxu0 0.0
  %525 = vmatprep.subr.mxu0 0.0
  %526 = vmatpush1.msra.mxu0 0.0
  %527 = vmatprep.subr.mxu0 0.0
  %528 = vmatpush1.msra.mxu0 0.0
  %529 = vmatprep.subr.mxu0 0.0
  %530 = vmatpush1.msra.mxu0 0.0
  %531 = vmatprep.subr.mxu0 0.0
  %532 = vmatpush1.msra.mxu0 0.0
  %533 = vmatprep.subr.mxu0 0.0
  %534 = vmatpush1.msra.mxu0 0.0
  %535 = vmatprep.mubr.f32.mxu0 0.0
  %536 = vmatmul.mubr.f32.gmra.mrb[0].mxu0 %v469
  %v537 = vpop.f32.mrb[0].mxu0
  %v538 = vadd.f32 0.0, %v537
  %v539 = vpop.f32.mrb[0].mxu0
  %540 = vdwg.mxu0
  %v541 = vadd.f32 %v152, %v538
  %v542 = vtanh.pop %v541
  %v543 = vmul.f32 %v542, 0.5
  %v544 = vadd.f32 %v543, 0.5
  %v545 = vmul.f32 %v544, %v459
  %547 = vrot.lane.b32.xlu0 %v542, 64
  %v548 = vpop.permute.xlu0 %547
  %v550 = vmul.f32 %v544, %v548
  %552 = vrot.lane.b32.xlu0 %v550, 32
  %v553 = vpop.permute.xlu0 %552
  %v555 = vadd.f32 %v545, %v553
  %v556 = vtanh.pop %v555
  %558 = vrot.lane.b32.xlu0 %v556, 64
  %v559 = vpop.permute.xlu0 %558
  %v561 = vmul.f32 %v544, %v559
  %563 = vrot.lane.b32.xlu0 %v561, 32
  %v564 = vpop.permute.xlu0 %563
  %v565 = vsel %vm179, %v564, 0
  %567 = vmatprep.subr.mxu0 0.0
  %568 = vmatpush1.msra.mxu0 %v175
  %569 = vmatprep.subr.mxu0 0.0
  %570 = vmatpush1.msra.mxu0 %v176
  %571 = vmatprep.subr.mxu0 0.0
  %572 = vmatpush1.msra.mxu0 %v177
  %573 = vmatprep.subr.mxu0 0.0
  %574 = vmatpush1.msra.mxu0 %v178
  %575 = vmatprep.subr.mxu0 0.0
  %576 = vmatpush1.msra.mxu0 0.0
  %577 = vmatprep.subr.mxu0 0.0
  %578 = vmatpush1.msra.mxu0 0.0
  %579 = vmatprep.subr.mxu0 0.0
  %580 = vmatpush1.msra.mxu0 0.0
  %581 = vmatprep.subr.mxu0 0.0
  %582 = vmatpush1.msra.mxu0 0.0
  %583 = vmatprep.subr.mxu0 0.0
  %584 = vmatpush1.msra.mxu0 0.0
  %585 = vmatprep.subr.mxu0 0.0
  %586 = vmatpush1.msra.mxu0 0.0
  %587 = vmatprep.subr.mxu0 0.0
  %588 = vmatpush1.msra.mxu0 0.0
  %589 = vmatprep.subr.mxu0 0.0
  %590 = vmatpush1.msra.mxu0 0.0
  %591 = vmatprep.subr.mxu0 0.0
  %592 = vmatpush1.msra.mxu0 0.0
  %593 = vmatprep.subr.mxu0 0.0
  %594 = vmatpush1.msra.mxu0 0.0
  %595 = vmatprep.subr.mxu0 0.0
  %596 = vmatpush1.msra.mxu0 0.0
  %597 = vmatprep.subr.mxu0 0.0
  %598 = vmatpush1.msra.mxu0 0.0
  %599 = vmatprep.subr.mxu0 0.0
  %600 = vmatpush1.msra.mxu0 0.0
  %601 = vmatprep.subr.mxu0 0.0
  %602 = vmatpush1.msra.mxu0 0.0
  %603 = vmatprep.subr.mxu0 0.0
  %604 = vmatpush1.msra.mxu0 0.0
  %605 = vmatprep.subr.mxu0 0.0
  %606 = vmatpush1.msra.mxu0 0.0
  %607 = vmatprep.subr.mxu0 0.0
  %608 = vmatpush1.msra.mxu0 0.0
  %609 = vmatprep.subr.mxu0 0.0
  %610 = vmatpush1.msra.mxu0 0.0
  %611 = vmatprep.subr.mxu0 0.0
  %612 = vmatpush1.msra.mxu0 0.0
  %613 = vmatprep.subr.mxu0 0.0
  %614 = vmatpush1.msra.mxu0 0.0
  %615 = vmatprep.subr.mxu0 0.0
  %616 = vmatpush1.msra.mxu0 0.0
  %617 = vmatprep.subr.mxu0 0.0
  %618 = vmatpush1.msra.mxu0 0.0
  %619 = vmatprep.subr.mxu0 0.0
  %620 = vmatpush1.msra.mxu0 0.0
  %621 = vmatprep.subr.mxu0 0.0
  %622 = vmatpush1.msra.mxu0 0.0
  %623 = vmatprep.subr.mxu0 0.0
  %624 = vmatpush1.msra.mxu0 0.0
  %625 = vmatprep.subr.mxu0 0.0
  %626 = vmatpush1.msra.mxu0 0.0
  %627 = vmatprep.subr.mxu0 0.0
  %628 = vmatpush1.msra.mxu0 0.0
  %629 = vmatprep.subr.mxu0 0.0
  %630 = vmatpush1.msra.mxu0 0.0
  %631 = vmatprep.mubr.f32.mxu0 0.0
  %632 = vmatmul.mubr.f32.gmra.mrb[0].mxu0 %v565
  %v633 = vpop.f32.mrb[0].mxu0
  %v634 = vadd.f32 0.0, %v633
  %v635 = vpop.f32.mrb[0].mxu0
  %636 = vdwg.mxu0
  %v637 = vadd.f32 %v157, %v634
  %v638 = vtanh.pop %v637
  %v639 = vmul.f32 %v638, 0.5
  %v640 = vadd.f32 %v639, 0.5
  %v641 = vmul.f32 %v640, %v555
  %643 = vrot.lane.b32.xlu0 %v638, 64
  %v644 = vpop.permute.xlu0 %643
  %v646 = vmul.f32 %v640, %v644
  %648 = vrot.lane.b32.xlu0 %v646, 32
  %v649 = vpop.permute.xlu0 %648
  %v651 = vadd.f32 %v641, %v649
  %v652 = vtanh.pop %v651
  %654 = vrot.lane.b32.xlu0 %v652, 64
  %v655 = vpop.permute.xlu0 %654
  %v657 = vmul.f32 %v640, %v655
  %659 = vrot.lane.b32.xlu0 %v657, 32
  %v660 = vpop.permute.xlu0 %659
  %v661 = vsel %vm179, %v660, 0
  %663 = vmatprep.subr.mxu0 0.0
  %664 = vmatpush1.msra.mxu0 %v175
  %665 = vmatprep.subr.mxu0 0.0
  %666 = vmatpush1.msra.mxu0 %v176
  %667 = vmatprep.subr.mxu0 0.0
  %668 = vmatpush1.msra.mxu0 %v177
  %669 = vmatprep.subr.mxu0 0.0
  %670 = vmatpush1.msra.mxu0 %v178
  %671 = vmatprep.subr.mxu0 0.0
  %672 = vmatpush1.msra.mxu0 0.0
  %673 = vmatprep.subr.mxu0 0.0
  %674 = vmatpush1.msra.mxu0 0.0
  %675 = vmatprep.subr.mxu0 0.0
  %676 = vmatpush1.msra.mxu0 0.0
  %677 = vmatprep.subr.mxu0 0.0
  %678 = vmatpush1.msra.mxu0 0.0
  %679 = vmatprep.subr.mxu0 0.0
  %680 = vmatpush1.msra.mxu0 0.0
  %681 = vmatprep.subr.mxu0 0.0
  %682 = vmatpush1.msra.mxu0 0.0
  %683 = vmatprep.subr.mxu0 0.0
  %684 = vmatpush1.msra.mxu0 0.0
  %685 = vmatprep.subr.mxu0 0.0
  %686 = vmatpush1.msra.mxu0 0.0
  %687 = vmatprep.subr.mxu0 0.0
  %688 = vmatpush1.msra.mxu0 0.0
  %689 = vmatprep.subr.mxu0 0.0
  %690 = vmatpush1.msra.mxu0 0.0
  %691 = vmatprep.subr.mxu0 0.0
  %692 = vmatpush1.msra.mxu0 0.0
  %693 = vmatprep.subr.mxu0 0.0
  %694 = vmatpush1.msra.mxu0 0.0
  %695 = vmatprep.subr.mxu0 0.0
  %696 = vmatpush1.msra.mxu0 0.0
  %697 = vmatprep.subr.mxu0 0.0
  %698 = vmatpush1.msra.mxu0 0.0
  %699 = vmatprep.subr.mxu0 0.0
  %700 = vmatpush1.msra.mxu0 0.0
  %701 = vmatprep.subr.mxu0 0.0
  %702 = vmatpush1.msra.mxu0 0.0
  %703 = vmatprep.subr.mxu0 0.0
  %704 = vmatpush1.msra.mxu0 0.0
  %705 = vmatprep.subr.mxu0 0.0
  %706 = vmatpush1.msra.mxu0 0.0
  %707 = vmatprep.subr.mxu0 0.0
  %708 = vmatpush1.msra.mxu0 0.0
  %709 = vmatprep.subr.mxu0 0.0
  %710 = vmatpush1.msra.mxu0 0.0
  %711 = vmatprep.subr.mxu0 0.0
  %712 = vmatpush1.msra.mxu0 0.0
  %713 = vmatprep.subr.mxu0 0.0
  %714 = vmatpush1.msra.mxu0 0.0
  %715 = vmatprep.subr.mxu0 0.0
  %716 = vmatpush1.msra.mxu0 0.0
  %717 = vmatprep.subr.mxu0 0.0
  %718 = vmatpush1.msra.mxu0 0.0
  %719 = vmatprep.subr.mxu0 0.0
  %720 = vmatpush1.msra.mxu0 0.0
  %721 = vmatprep.subr.mxu0 0.0
  %722 = vmatpush1.msra.mxu0 0.0
  %723 = vmatprep.subr.mxu0 0.0
  %724 = vmatpush1.msra.mxu0 0.0
  %725 = vmatprep.subr.mxu0 0.0
  %726 = vmatpush1.msra.mxu0 0.0
  %727 = vmatprep.mubr.f32.mxu0 0.0
  %728 = vmatmul.mubr.f32.gmra.mrb[0].mxu0 %v661
  %v729 = vpop.f32.mrb[0].mxu0
  %v730 = vadd.f32 0.0, %v729
  %v731 = vpop.f32.mrb[0].mxu0
  %732 = vdwg.mxu0
  %v733 = vadd.f32 %v162, %v730
  %v734 = vtanh.pop %v733
  %v735 = vmul.f32 %v734, 0.5
  %v736 = vadd.f32 %v735, 0.5
  %v737 = vmul.f32 %v736, %v651
  %739 = vrot.lane.b32.xlu0 %v734, 64
  %v740 = vpop.permute.xlu0 %739
  %v742 = vmul.f32 %v736, %v740
  %744 = vrot.lane.b32.xlu0 %v742, 32
  %v745 = vpop.permute.xlu0 %744
  %v747 = vadd.f32 %v737, %v745
  %v748 = vtanh.pop %v747
  %750 = vrot.lane.b32.xlu0 %v748, 64
  %v751 = vpop.permute.xlu0 %750
  %v753 = vmul.f32 %v736, %v751
  %755 = vrot.lane.b32.xlu0 %v753, 32
  %v756 = vpop.permute.xlu0 %755
  %v757 = vsel %vm179, %v756, 0
  %759 = vmatprep.subr.mxu0 0.0
  %760 = vmatpush1.msra.mxu0 %v175
  %761 = vmatprep.subr.mxu0 0.0
  %762 = vmatpush1.msra.mxu0 %v176
  %763 = vmatprep.subr.mxu0 0.0
  %764 = vmatpush1.msra.mxu0 %v177
  %765 = vmatprep.subr.mxu0 0.0
  %766 = vmatpush1.msra.mxu0 %v178
  %767 = vmatprep.subr.mxu0 0.0
  %768 = vmatpush1.msra.mxu0 0.0
  %769 = vmatprep.subr.mxu0 0.0
  %770 = vmatpush1.msra.mxu0 0.0
  %771 = vmatprep.subr.mxu0 0.0
  %772 = vmatpush1.msra.mxu0 0.0
  %773 = vmatprep.subr.mxu0 0.0
  %774 = vmatpush1.msra.mxu0 0.0
  %775 = vmatprep.subr.mxu0 0.0
  %776 = vmatpush1.msra.mxu0 0.0
  %777 = vmatprep.subr.mxu0 0.0
  %778 = vmatpush1.msra.mxu0 0.0
  %779 = vmatprep.subr.mxu0 0.0
  %780 = vmatpush1.msra.mxu0 0.0
  %781 = vmatprep.subr.mxu0 0.0
  %782 = vmatpush1.msra.mxu0 0.0
  %783 = vmatprep.subr.mxu0 0.0
  %784 = vmatpush1.msra.mxu0 0.0
  %785 = vmatprep.subr.mxu0 0.0
  %786 = vmatpush1.msra.mxu0 0.0
  %787 = vmatprep.subr.mxu0 0.0
  %788 = vmatpush1.msra.mxu0 0.0
  %789 = vmatprep.subr.mxu0 0.0
  %790 = vmatpush1.msra.mxu0 0.0
  %791 = vmatprep.subr.mxu0 0.0
  %792 = vmatpush1.msra.mxu0 0.0
  %793 = vmatprep.subr.mxu0 0.0
  %794 = vmatpush1.msra.mxu0 0.0
  %795 = vmatprep.subr.mxu0 0.0
  %796 = vmatpush1.msra.mxu0 0.0
  %797 = vmatprep.subr.mxu0 0.0
  %798 = vmatpush1.msra.mxu0 0.0
  %799 = vmatprep.subr.mxu0 0.0
  %800 = vmatpush1.msra.mxu0 0.0
  %801 = vmatprep.subr.mxu0 0.0
  %802 = vmatpush1.msra.mxu0 0.0
  %803 = vmatprep.subr.mxu0 0.0
  %804 = vmatpush1.msra.mxu0 0.0
  %805 = vmatprep.subr.mxu0 0.0
  %806 = vmatpush1.msra.mxu0 0.0
  %807 = vmatprep.subr.mxu0 0.0
  %808 = vmatpush1.msra.mxu0 0.0
  %809 = vmatprep.subr.mxu0 0.0
  %810 = vmatpush1.msra.mxu0 0.0
  %811 = vmatprep.subr.mxu0 0.0
  %812 = vmatpush1.msra.mxu0 0.0
  %813 = vmatprep.subr.mxu0 0.0
  %814 = vmatpush1.msra.mxu0 0.0
  %815 = vmatprep.subr.mxu0 0.0
  %816 = vmatpush1.msra.mxu0 0.0
  %817 = vmatprep.subr.mxu0 0.0
  %818 = vmatpush1.msra.mxu0 0.0
  %819 = vmatprep.subr.mxu0 0.0
  %820 = vmatpush1.msra.mxu0 0.0
  %821 = vmatprep.subr.mxu0 0.0
  %822 = vmatpush1.msra.mxu0 0.0
  %823 = vmatprep.mubr.f32.mxu0 0.0
  %824 = vmatmul.mubr.f32.gmra.mrb[0].mxu0 %v757
  %v825 = vpop.f32.mrb[0].mxu0
  %v826 = vadd.f32 0.0, %v825
  %v827 = vpop.f32.mrb[0].mxu0
  %828 = vdwg.mxu0
  %v829 = vadd.f32 %v167, %v826
  %v830 = vtanh.pop %v829
  %v831 = vmul.f32 %v830, 0.5
  %v832 = vadd.f32 %v831, 0.5
  %v833 = vmul.f32 %v832, %v747
  %835 = vrot.lane.b32.xlu0 %v830, 64
  %v836 = vpop.permute.xlu0 %835
  %v838 = vmul.f32 %v832, %v836
  %840 = vrot.lane.b32.xlu0 %v838, 32
  %v841 = vpop.permute.xlu0 %840
  %v843 = vadd.f32 %v833, %v841
  %v844 = vtanh.pop %v843
  %846 = vrot.lane.b32.xlu0 %v844, 64
  %v847 = vpop.permute.xlu0 %846
  %v849 = vmul.f32 %v832, %v847
  %851 = vrot.lane.b32.xlu0 %v849, 32
  %v852 = vpop.permute.xlu0 %851
  %v853 = vsel %vm179, %v852, 0
  %855 = vmatprep.subr.mxu0 0.0
  %856 = vmatpush1.msra.mxu0 %v175
  %857 = vmatprep.subr.mxu0 0.0
  %858 = vmatpush1.msra.mxu0 %v176
  %859 = vmatprep.subr.mxu0 0.0
  %860 = vmatpush1.msra.mxu0 %v177
  %861 = vmatprep.subr.mxu0 0.0
  %862 = vmatpush1.msra.mxu0 %v178
  %863 = vmatprep.subr.mxu0 0.0
  %864 = vmatpush1.msra.mxu0 0.0
  %865 = vmatprep.subr.mxu0 0.0
  %866 = vmatpush1.msra.mxu0 0.0
  %867 = vmatprep.subr.mxu0 0.0
  %868 = vmatpush1.msra.mxu0 0.0
  %869 = vmatprep.subr.mxu0 0.0
  %870 = vmatpush1.msra.mxu0 0.0
  %871 = vmatprep.subr.mxu0 0.0
  %872 = vmatpush1.msra.mxu0 0.0
  %873 = vmatprep.subr.mxu0 0.0
  %874 = vmatpush1.msra.mxu0 0.0
  %875 = vmatprep.subr.mxu0 0.0
  %876 = vmatpush1.msra.mxu0 0.0
  %877 = vmatprep.subr.mxu0 0.0
  %878 = vmatpush1.msra.mxu0 0.0
  %879 = vmatprep.subr.mxu0 0.0
  %880 = vmatpush1.msra.mxu0 0.0
  %881 = vmatprep.subr.mxu0 0.0
  %882 = vmatpush1.msra.mxu0 0.0
  %883 = vmatprep.subr.mxu0 0.0
  %884 = vmatpush1.msra.mxu0 0.0
  %885 = vmatprep.subr.mxu0 0.0
  %886 = vmatpush1.msra.mxu0 0.0
  %887 = vmatprep.subr.mxu0 0.0
  %888 = vmatpush1.msra.mxu0 0.0
  %889 = vmatprep.subr.mxu0 0.0
  %890 = vmatpush1.msra.mxu0 0.0
  %891 = vmatprep.subr.mxu0 0.0
  %892 = vmatpush1.msra.mxu0 0.0
  %893 = vmatprep.subr.mxu0 0.0
  %894 = vmatpush1.msra.mxu0 0.0
  %895 = vmatprep.subr.mxu0 0.0
  %896 = vmatpush1.msra.mxu0 0.0
  %897 = vmatprep.subr.mxu0 0.0
  %898 = vmatpush1.msra.mxu0 0.0
  %899 = vmatprep.subr.mxu0 0.0
  %900 = vmatpush1.msra.mxu0 0.0
  %901 = vmatprep.subr.mxu0 0.0
  %902 = vmatpush1.msra.mxu0 0.0
  %903 = vmatprep.subr.mxu0 0.0
  %904 = vmatpush1.msra.mxu0 0.0
  %905 = vmatprep.subr.mxu0 0.0
  %906 = vmatpush1.msra.mxu0 0.0
  %907 = vmatprep.subr.mxu0 0.0
  %908 = vmatpush1.msra.mxu0 0.0
  %909 = vmatprep.subr.mxu0 0.0
  %910 = vmatpush1.msra.mxu0 0.0
  %911 = vmatprep.subr.mxu0 0.0
  %912 = vmatpush1.msra.mxu0 0.0
  %913 = vmatprep.subr.mxu0 0.0
  %914 = vmatpush1.msra.mxu0 0.0
  %915 = vmatprep.subr.mxu0 0.0
  %916 = vmatpush1.msra.mxu0 0.0
  %917 = vmatprep.subr.mxu0 0.0
  %918 = vmatpush1.msra.mxu0 0.0
  %919 = vmatprep.mubr.f32.mxu0 0.0
  %920 = vmatmul.mubr.f32.gmra.mrb[0].mxu0 %v853
  %v921 = vpop.f32.mrb[0].mxu0
  %v922 = vadd.f32 0.0, %v921
  %v923 = vpop.f32.mrb[0].mxu0
  %924 = vdwg.mxu0
  %v925 = vadd.f32 %v172, %v922
  %v926 = vtanh.pop %v925
  %v927 = vmul.f32 %v926, 0.5
  %v928 = vadd.f32 %v927, 0.5
  %v929 = vmul.f32 %v928, %v843
  %931 = vrot.lane.b32.xlu0 %v926, 64
  %v932 = vpop.permute.xlu0 %931
  %v934 = vmul.f32 %v928, %v932
  %936 = vrot.lane.b32.xlu0 %v934, 32
  %v937 = vpop.permute.xlu0 %936
  %v939 = vadd.f32 %v929, %v937
  %v940 = vtanh.pop %v939
  %942 = vrot.lane.b32.xlu0 %v940, 64
  %v943 = vpop.permute.xlu0 %942
  %v945 = vmul.f32 %v928, %v943
  %v946 = vld [vmem:[%s4] sm:$0x1]
  %v948 = vlaneseq
  %v949 = vshrl.u32 %v948, 7
  %v950 = vsub.s32 0, %v949
  %v951 = vrot.slane %v946, %v950
  %952 = vrot.lane.b32.xlu0 %v951, 96
  %v953 = vpop.permute.xlu0 %952
  %v955 = vmul.f32 %v945, %v953
  %957 = vrot.lane.b32.xlu0 %v955, 32
  %v958 = vpop.permute.xlu0 %957
  %v960 = vsel %vm179, %v958, 0.0
  %961 = vadd.xlane.f32.xlu0 %v960
  %v962 = vpop.xlane.xlu0 %961
  %v963 = vld [vmem:[#allocation2] sm:$0x1]
  %v965 = vlaneseq
  %v966 = vshrl.u32 %v965, 7
  %v967 = vsub.s32 0, %v966
  %v968 = vrot.slane %v963, %v967
  %v970 = vadd.f32 %v962, %v968
  %vm971 = vcmask 7168
  %972 = vst.msk [vmem:[%s6] sm:$0xff] %vm971, %v970
  // Predicated region
  $region26: #{tpu_custom_call.1} parent=0 // pred_check
    _
  $region27: #{tpu_custom_call.1} parent=0 // pred_check_branch
    %974 = sbr.rel (0) target = $region29
  $region28: #{tpu_custom_call.1} parent=0 // pred_region
    _
  $region29: #{tpu_custom_call.1} parent=0 // pred_fallthru
    _
  // Predicated region
  $region30: #{tpu_custom_call.1} parent=0 // pred_check
    _
  $region31: #{tpu_custom_call.1} parent=0 // pred_check_branch
    %976 = sbr.rel (0) target = $region33
  $region32: #{tpu_custom_call.1} parent=0 // pred_region
    _
  $region33: #{tpu_custom_call.1} parent=0 // pred_fallthru
    _

</llo_original>
